<compile_context>
chip_gen: v6e
topology: v6e:2x2x1
jax: 0.10.0
libtpu: 0.0.40
codegen_flags: <defaults>
</compile_context>

<pallas_src>
import functools

import jax
import jax.numpy as jnp
from jax import lax
from jax.experimental import pallas as pl
from jax.experimental.pallas import tpu as pltpu


def temporal_block_kernel(x_ref, w1_ref, b1_ref, w2_ref, b2_ref, *rest,
                          kernel_size, dilation, padding, has_downsample):
    if has_downsample:
        wd_ref, bd_ref, out_ref, x_ext, h_ext = rest
    else:
        out_ref, x_ext, h_ext = rest

    K, d, p = kernel_size, dilation, padding
    Lt = out_ref.shape[2]
    t = pl.program_id(1)

    # ---- causal halo: first p lanes of the extended (C, p + Lt) buffers ------------
    @pl.when(t == 0)
    def _():                                     # left edge of the sequence -> zeros
        x_ext[:, :p] = jnp.zeros((x_ext.shape[0], p), jnp.float32)
        h_ext[:, :p] = jnp.zeros((h_ext.shape[0], p), jnp.float32)

    @pl.when(t > 0)
    def _():                                     # carry the previous tile's tail
        x_tail = x_ext[:, Lt:Lt + p]
        h_tail = h_ext[:, Lt:Lt + p]
        x_ext[:, :p] = x_tail
        h_ext[:, :p] = h_tail

    x_tile = x_ref[0]                            # (C_in, Lt), time on the lane axis
    x_ext[:, p:] = x_tile

    # ---- conv1 (dilated, causal) + folded BN1 + ReLU: K accumulated matmuls --------
    acc1 = jnp.dot(w1_ref[0], x_ext[:, 0:Lt], preferred_element_type=jnp.float32)
    for k in range(1, K):
        acc1 = acc1 + jnp.dot(w1_ref[k], x_ext[:, k * d:k * d + Lt],
                              preferred_element_type=jnp.float32)
    h = jnp.maximum(acc1 + b1_ref[...], 0.0)     # (C_out, Lt); dropout1 = identity

    h_ext[:, p:] = h

    # ---- conv2 (dilated, causal) + folded BN2 + ReLU --------------------------------
    acc2 = jnp.dot(w2_ref[0], h_ext[:, 0:Lt], preferred_element_type=jnp.float32)
    for k in range(1, K):
        acc2 = acc2 + jnp.dot(w2_ref[k], h_ext[:, k * d:k * d + Lt],
                              preferred_element_type=jnp.float32)
    h2 = jnp.maximum(acc2 + b2_ref[...], 0.0)    # dropout2 = identity

    # ---- residual branch (1x1 conv, or identity specialized away) + final ReLU ------
    if has_downsample:
        res = jnp.dot(wd_ref[...], x_tile,
                      preferred_element_type=jnp.float32) + bd_ref[...]
    else:
        res = x_tile
    out_ref[0] = jnp.maximum(h2 + res, 0.0).astype(out_ref.dtype)


def _pick_l_tile(seq_len, padding, target=512):
    """Largest multiple-of-128 time tile <= target that divides L and covers the halo.
    Falls back to the full time axis (no time tiling) if none exists."""
    if seq_len <= target:
        return seq_len
    cand = (target // 128) * 128
    while cand >= 128:
        if seq_len % cand == 0 and cand >= padding:
            return cand
        cand -= 128
    return seq_len


def temporal_block_forward(x, params, *, kernel_size, stride, dilation, padding,
                           eps=1e-5, l_tile_target=512):
    """x: (B, C_in, L) float32, PyTorch Conv1d layout. Returns (B, C_out, L)."""
    assert stride == 1, "TemporalBlock residual add requires stride == 1"
    assert padding == dilation * (kernel_size - 1), "causal TCN padding expected"
    B, C_in, L = x.shape
    K = kernel_size
    C_out = params["conv1_w"].shape[0]

    def fold_conv_bn(w, b, gamma, beta, mean, var):
        # torch conv weight (C_out, C_in, K) -> (K, C_out, C_in); fold the eval-mode
        # BatchNorm per-output-channel affine into the weights and bias (free at runtime).
        w_t = jnp.transpose(w, (2, 0, 1))
        scale = gamma / jnp.sqrt(var + eps)
        w_eff = w_t * scale[None, :, None]
        b_eff = ((b - mean) * scale + beta)[:, None]
        return w_eff.astype(jnp.float32), b_eff.astype(jnp.float32)

    w1f, b1f = fold_conv_bn(params["conv1_w"], params["conv1_b"],
                            params["bn1_gamma"], params["bn1_beta"],
                            params["bn1_mean"], params["bn1_var"])
    w2f, b2f = fold_conv_bn(params["conv2_w"], params["conv2_b"],
                            params["bn2_gamma"], params["bn2_beta"],
                            params["bn2_mean"], params["bn2_var"])

    has_downsample = "down_w" in params
    L_tile = _pick_l_tile(L, padding, l_tile_target)
    num_l_tiles = L // L_tile

    inputs = [x.astype(jnp.float32), w1f, b1f, w2f, b2f]
    in_specs = [
        pl.BlockSpec((1, C_in, L_tile), lambda b, t: (b, 0, t)),     # x tile
        pl.BlockSpec((K, C_out, C_in), lambda b, t: (0, 0, 0)),      # w1 (BN1 folded)
        pl.BlockSpec((C_out, 1), lambda b, t: (0, 0)),               # b1
        pl.BlockSpec((K, C_out, C_out), lambda b, t: (0, 0, 0)),     # w2 (BN2 folded)
        pl.BlockSpec((C_out, 1), lambda b, t: (0, 0)),               # b2
    ]
    if has_downsample:                                               # 1x1 Conv1d(C_in, C_out)
        wd = params["down_w"][:, :, 0].astype(jnp.float32)           # (C_out, C_in)
        bd = params["down_b"][:, None].astype(jnp.float32)           # (C_out, 1)
        inputs += [wd, bd]
        in_specs += [pl.BlockSpec((C_out, C_in), lambda b, t: (0, 0)),
                     pl.BlockSpec((C_out, 1), lambda b, t: (0, 0))]

    kern = functools.partial(temporal_block_kernel, kernel_size=K,
                             dilation=dilation, padding=padding,
                             has_downsample=has_downsample)

    return pl.pallas_call(
        kern,
        out_shape=jax.ShapeDtypeStruct((B, C_out, L), jnp.float32),
        grid_spec=pltpu.PrefetchScalarGridSpec(
            num_scalar_prefetch=0,
            grid=(B, num_l_tiles),
            in_specs=in_specs,
            out_specs=pl.BlockSpec((1, C_out, L_tile), lambda b, t: (b, 0, t)),
            scratch_shapes=[
                pltpu.VMEM((C_in, L_tile + padding), jnp.float32),   # x causal-halo buffer
                pltpu.VMEM((C_out, L_tile + padding), jnp.float32),  # h causal-halo buffer
            ]),
        compiler_params=pltpu.CompilerParams(
            dimension_semantics=("parallel", "arbitrary"),
            vmem_limit_bytes=32 * 1024 * 1024),
    )(*inputs)


def reference(x, params, *, kernel_size, stride, dilation, padding, eps=1e-5):
    """Pure-JAX eval-mode TemporalBlock forward (independent of the kernel)."""
    def conv1d(inp, w, b, pad, dil):
        y = lax.conv_general_dilated(
            inp, w, window_strides=(stride,), padding=[(pad, pad)],
            rhs_dilation=(dil,), dimension_numbers=("NCH", "OIH", "NCH"))
        return y + b[None, :, None]

    def bn(inp, gamma, beta, mean, var):
        s = gamma / jnp.sqrt(var + eps)
        return (inp - mean[None, :, None]) * s[None, :, None] + beta[None, :, None]

    h = conv1d(x, params["conv1_w"], params["conv1_b"], padding, dilation)
    h = bn(h, params["bn1_gamma"], params["bn1_beta"],
           params["bn1_mean"], params["bn1_var"])
    h = h[:, :, :-padding]                         # chomp1
    h = jax.nn.relu(h)                             # relu1 (dropout1 identity)
    h = conv1d(h, params["conv2_w"], params["conv2_b"], padding, dilation)
    h = bn(h, params["bn2_gamma"], params["bn2_beta"],
           params["bn2_mean"], params["bn2_var"])
    h = h[:, :, :-padding]                         # chomp2
    h = jax.nn.relu(h)                             # relu2 (dropout2 identity)
    if "down_w" in params:
        res = conv1d(x, params["down_w"], params["down_b"], 0, 1)
    else:
        res = x
    return jax.nn.relu(h + res)


if __name__ == "__main__":
    # Small shapes consistent with the module: batch=2, in_ch=4, out_ch=8, seq=16.
    B, C_in, C_out, L = 2, 4, 8, 16
    K, stride, dilation = 3, 1, 2
    padding = (K - 1) * dilation                   # causal TCN padding = 4

    key = jax.random.PRNGKey(0)
    ks = jax.random.split(key, 20)

    def u(k, shape, bound):
        return jax.random.uniform(k, shape, jnp.float32, -bound, bound)

    b1w = 1.0 / (C_in * K) ** 0.5
    b2w = 1.0 / (C_out * K) ** 0.5
    bdw = 1.0 / C_in ** 0.5

    params = {
        "conv1_w": u(ks[0], (C_out, C_in, K), b1w),
        "conv1_b": u(ks[1], (C_out,), b1w),
        "bn1_gamma": jax.random.uniform(ks[2], (C_out,), jnp.float32, 0.5, 1.5),
        "bn1_beta": 0.2 * jax.random.normal(ks[3], (C_out,), jnp.float32),
        "bn1_mean": 0.3 * jax.random.normal(ks[4], (C_out,), jnp.float32),
        "bn1_var": jax.random.uniform(ks[5], (C_out,), jnp.float32, 0.5, 1.5),
        "conv2_w": u(ks[6], (C_out, C_out, K), b2w),
        "conv2_b": u(ks[7], (C_out,), b2w),
        "bn2_gamma": jax.random.uniform(ks[8], (C_out,), jnp.float32, 0.5, 1.5),
        "bn2_beta": 0.2 * jax.random.normal(ks[9], (C_out,), jnp.float32),
        "bn2_mean": 0.3 * jax.random.normal(ks[10], (C_out,), jnp.float32),
        "bn2_var": jax.random.uniform(ks[11], (C_out,), jnp.float32, 0.5, 1.5),
        "down_w": u(ks[12], (C_out, C_in, 1), bdw),   # in_ch != out_ch -> downsample
        "down_b": u(ks[13], (C_out,), bdw),
    }
    x = jax.random.normal(ks[14], (B, C_in, L), dtype=jnp.float32)

    out = temporal_block_forward(x, params, kernel_size=K, stride=stride,
                                 dilation=dilation, padding=padding)
    out = jax.block_until_ready(out)
    out_ref = reference(x, params, kernel_size=K, stride=stride,
                        dilation=dilation, padding=padding)
    assert out.shape == (B, C_out, L)
    assert jnp.allclose(out, out_ref, atol=1e-4, rtol=1e-4), (
        float(jnp.max(jnp.abs(out - out_ref))))

    # Identity-residual variant (in_ch == out_ch): exercises the specialized path
    # that skips the downsample matmul entirely.
    params_id = {k: v for k, v in params.items() if not k.startswith("down_")}
    params_id["conv1_w"] = u(ks[15], (C_out, C_out, K), b2w)
    params_id["conv1_b"] = u(ks[16], (C_out,), b2w)
    x_id = jax.random.normal(ks[17], (B, C_out, L), dtype=jnp.float32)
    out_id = jax.block_until_ready(
        temporal_block_forward(x_id, params_id, kernel_size=K, stride=stride,
                               dilation=dilation, padding=padding))
    out_id_ref = reference(x_id, params_id, kernel_size=K, stride=stride,
                           dilation=dilation, padding=padding)
    assert jnp.allclose(out_id, out_id_ref, atol=1e-4, rtol=1e-4), (
        float(jnp.max(jnp.abs(out_id - out_id_ref))))

    print("KERNEL_OK")
</pallas_src>

<mosaic_0001>
module attributes {stable_mosaic.version = 11 : i64} {
  func.func @temporal_block_kernel(%arg0: i32, %arg1: i32, %arg2: memref<1x4x16xf32, #tpu.memory_space<vmem>>, %arg3: memref<3x8x4xf32, #tpu.memory_space<vmem>>, %arg4: memref<8x1xf32, #tpu.memory_space<vmem>>, %arg5: memref<3x8x8xf32, #tpu.memory_space<vmem>>, %arg6: memref<8x1xf32, #tpu.memory_space<vmem>>, %arg7: memref<8x4xf32, #tpu.memory_space<vmem>>, %arg8: memref<8x1xf32, #tpu.memory_space<vmem>>, %arg9: memref<1x8x16xf32, #tpu.memory_space<vmem>>, %arg10: memref<4x20xf32, #tpu.memory_space<vmem>>, %arg11: memref<8x20xf32, #tpu.memory_space<vmem>>) attributes {dimension_semantics = [#tpu.dimension_semantics<parallel>, #tpu.dimension_semantics<arbitrary>], iteration_bounds = array<i64: 2, 1>, scalar_prefetch = 0 : i64, scratch_operands = 2 : i64, tpu.core_type = #tpu.core_type<tc>, window_params = [{transform_indices = @transform_0, window_bounds = array<i64: 1, 4, 16>}, {pipeline_mode = #tpu.pipeline_mode<synchronous>, transform_indices = @transform_1, window_bounds = array<i64: 3, 8, 4>}, {pipeline_mode = #tpu.pipeline_mode<synchronous>, transform_indices = @transform_2, window_bounds = array<i64: 8, 1>}, {pipeline_mode = #tpu.pipeline_mode<synchronous>, transform_indices = @transform_3, window_bounds = array<i64: 3, 8, 8>}, {pipeline_mode = #tpu.pipeline_mode<synchronous>, transform_indices = @transform_4, window_bounds = array<i64: 8, 1>}, {pipeline_mode = #tpu.pipeline_mode<synchronous>, transform_indices = @transform_5, window_bounds = array<i64: 8, 4>}, {pipeline_mode = #tpu.pipeline_mode<synchronous>, transform_indices = @transform_6, window_bounds = array<i64: 8, 1>}, {transform_indices = @transform_7, window_bounds = array<i64: 1, 8, 16>}]} {
    %c0_i32 = arith.constant 0 : i32
    %0 = arith.cmpi eq, %arg1, %c0_i32 : i32
    %1 = arith.extui %0 : i1 to i32
    %c0_i32_0 = arith.constant 0 : i32
    %2 = arith.cmpi ne, %1, %c0_i32_0 : i32
    scf.if %2 {
      %cst_56 = arith.constant 0.000000e+00 : f32
      %59 = vector.broadcast %cst_56 : f32 to vector<4x4xf32>
      %c0_57 = arith.constant 0 : index
      %c0_58 = arith.constant 0 : index
      %60 = vector.load %arg10[%c0_57, %c0_58] : memref<4x20xf32, #tpu.memory_space<vmem>>, vector<4x4xf32>
      tpu.vector_store %arg10[%c0_57, %c0_58], %59 {strides = array<i32>} : memref<4x20xf32, #tpu.memory_space<vmem>>, vector<4x4xf32>,
      %cst_59 = arith.constant 0.000000e+00 : f32
      %61 = vector.broadcast %cst_59 : f32 to vector<8x4xf32>
      %c0_60 = arith.constant 0 : index
      %c0_61 = arith.constant 0 : index
      %62 = vector.load %arg11[%c0_60, %c0_61] : memref<8x20xf32, #tpu.memory_space<vmem>>, vector<8x4xf32>
      tpu.vector_store %arg11[%c0_60, %c0_61], %61 {strides = array<i32>} : memref<8x20xf32, #tpu.memory_space<vmem>>, vector<8x4xf32>,
    } else {
    }
    %c0_i32_1 = arith.constant 0 : i32
    %3 = arith.cmpi sgt, %arg1, %c0_i32_1 : i32
    %4 = arith.extui %3 : i1 to i32
    %c0_i32_2 = arith.constant 0 : i32
    %5 = arith.cmpi ne, %4, %c0_i32_2 : i32
    scf.if %5 {
      %c0_56 = arith.constant 0 : index
      %c16 = arith.constant 16 : index
      %59 = vector.load %arg10[%c0_56, %c16] : memref<4x20xf32, #tpu.memory_space<vmem>>, vector<4x4xf32>
      %c0_57 = arith.constant 0 : index
      %c16_58 = arith.constant 16 : index
      %60 = vector.load %arg11[%c0_57, %c16_58] : memref<8x20xf32, #tpu.memory_space<vmem>>, vector<8x4xf32>
      %c0_59 = arith.constant 0 : index
      %c0_60 = arith.constant 0 : index
      %61 = vector.load %arg10[%c0_59, %c0_60] : memref<4x20xf32, #tpu.memory_space<vmem>>, vector<4x4xf32>
      tpu.vector_store %arg10[%c0_59, %c0_60], %59 {strides = array<i32>} : memref<4x20xf32, #tpu.memory_space<vmem>>, vector<4x4xf32>,
      %c0_61 = arith.constant 0 : index
      %c0_62 = arith.constant 0 : index
      %62 = vector.load %arg11[%c0_61, %c0_62] : memref<8x20xf32, #tpu.memory_space<vmem>>, vector<8x4xf32>
      tpu.vector_store %arg11[%c0_61, %c0_62], %60 {strides = array<i32>} : memref<8x20xf32, #tpu.memory_space<vmem>>, vector<8x4xf32>,
    } else {
    }
    %c0 = arith.constant 0 : index
    %c0_3 = arith.constant 0 : index
    %c0_4 = arith.constant 0 : index
    %6 = vector.load %arg2[%c0, %c0_3, %c0_4] : memref<1x4x16xf32, #tpu.memory_space<vmem>>, vector<1x4x16xf32>
    %7 = vector.shape_cast %6 : vector<1x4x16xf32> to vector<4x16xf32>
    %c0_5 = arith.constant 0 : index
    %c4 = arith.constant 4 : index
    %8 = vector.load %arg10[%c0_5, %c4] : memref<4x20xf32, #tpu.memory_space<vmem>>, vector<4x16xf32>
    tpu.vector_store %arg10[%c0_5, %c4], %7 {strides = array<i32>} : memref<4x20xf32, #tpu.memory_space<vmem>>, vector<4x16xf32>,
    %c0_6 = arith.constant 0 : index
    %c0_7 = arith.constant 0 : index
    %c0_8 = arith.constant 0 : index
    %9 = vector.load %arg3[%c0_6, %c0_7, %c0_8] : memref<3x8x4xf32, #tpu.memory_space<vmem>>, vector<1x8x4xf32>
    %10 = vector.shape_cast %9 : vector<1x8x4xf32> to vector<8x4xf32>
    %c0_9 = arith.constant 0 : index
    %c0_10 = arith.constant 0 : index
    %11 = vector.load %arg10[%c0_9, %c0_10] : memref<4x20xf32, #tpu.memory_space<vmem>>, vector<4x16xf32>
    %cst = arith.constant dense<0.000000e+00> : vector<8x16xf32>
    %12 = tpu.matmul %10, %11, %cst {dimension_numbers = #tpu.dot_dimension_numbers<[1], [0], [0], [1], [0, 0, 1, 1], [], []>} : vector<8x4xf32>, vector<4x16xf32>, vector<8x16xf32> -> vector<8x16xf32>
    %c1 = arith.constant 1 : index
    %c0_11 = arith.constant 0 : index
    %c0_12 = arith.constant 0 : index
    %13 = vector.load %arg3[%c1, %c0_11, %c0_12] : memref<3x8x4xf32, #tpu.memory_space<vmem>>, vector<1x8x4xf32>
    %14 = vector.shape_cast %13 : vector<1x8x4xf32> to vector<8x4xf32>
    %c0_13 = arith.constant 0 : index
    %c2 = arith.constant 2 : index
    %15 = vector.load %arg10[%c0_13, %c2] : memref<4x20xf32, #tpu.memory_space<vmem>>, vector<4x16xf32>
    %cst_14 = arith.constant dense<0.000000e+00> : vector<8x16xf32>
    %16 = tpu.matmul %14, %15, %cst_14 {dimension_numbers = #tpu.dot_dimension_numbers<[1], [0], [0], [1], [0, 0, 1, 1], [], []>} : vector<8x4xf32>, vector<4x16xf32>, vector<8x16xf32> -> vector<8x16xf32>
    %17 = arith.addf %12, %16 : vector<8x16xf32>
    %c2_15 = arith.constant 2 : index
    %c0_16 = arith.constant 0 : index
    %c0_17 = arith.constant 0 : index
    %18 = vector.load %arg3[%c2_15, %c0_16, %c0_17] : memref<3x8x4xf32, #tpu.memory_space<vmem>>, vector<1x8x4xf32>
    %19 = vector.shape_cast %18 : vector<1x8x4xf32> to vector<8x4xf32>
    %c0_18 = arith.constant 0 : index
    %c4_19 = arith.constant 4 : index
    %20 = vector.load %arg10[%c0_18, %c4_19] : memref<4x20xf32, #tpu.memory_space<vmem>>, vector<4x16xf32>
    %cst_20 = arith.constant dense<0.000000e+00> : vector<8x16xf32>
    %21 = tpu.matmul %19, %20, %cst_20 {dimension_numbers = #tpu.dot_dimension_numbers<[1], [0], [0], [1], [0, 0, 1, 1], [], []>} : vector<8x4xf32>, vector<4x16xf32>, vector<8x16xf32> -> vector<8x16xf32>
    %22 = arith.addf %17, %21 : vector<8x16xf32>
    %c0_21 = arith.constant 0 : index
    %c0_22 = arith.constant 0 : index
    %23 = vector.load %arg4[%c0_21, %c0_22] : memref<8x1xf32, #tpu.memory_space<vmem>>, vector<8x1xf32>
    %24 = vector.broadcast %23 : vector<8x1xf32> to vector<8x16xf32>
    %25 = arith.addf %22, %24 : vector<8x16xf32>
    %cst_23 = arith.constant 0.000000e+00 : f32
    %26 = vector.broadcast %cst_23 : f32 to vector<8x16xf32>
    %27 = arith.maximumf %25, %26 : vector<8x16xf32>
    %c0_24 = arith.constant 0 : index
    %c4_25 = arith.constant 4 : index
    %28 = vector.load %arg11[%c0_24, %c4_25] : memref<8x20xf32, #tpu.memory_space<vmem>>, vector<8x16xf32>
    tpu.vector_store %arg11[%c0_24, %c4_25], %27 {strides = array<i32>} : memref<8x20xf32, #tpu.memory_space<vmem>>, vector<8x16xf32>,
    %c0_26 = arith.constant 0 : index
    %c0_27 = arith.constant 0 : index
    %c0_28 = arith.constant 0 : index
    %29 = vector.load %arg5[%c0_26, %c0_27, %c0_28] : memref<3x8x8xf32, #tpu.memory_space<vmem>>, vector<1x8x8xf32>
    %30 = vector.shape_cast %29 : vector<1x8x8xf32> to vector<8x8xf32>
    %c0_29 = arith.constant 0 : index
    %c0_30 = arith.constant 0 : index
    %31 = vector.load %arg11[%c0_29, %c0_30] : memref<8x20xf32, #tpu.memory_space<vmem>>, vector<8x16xf32>
    %cst_31 = arith.constant dense<0.000000e+00> : vector<8x16xf32>
    %32 = tpu.matmul %30, %31, %cst_31 {dimension_numbers = #tpu.dot_dimension_numbers<[1], [0], [0], [1], [0, 0, 1, 1], [], []>} : vector<8x8xf32>, vector<8x16xf32>, vector<8x16xf32> -> vector<8x16xf32>
    %c1_32 = arith.constant 1 : index
    %c0_33 = arith.constant 0 : index
    %c0_34 = arith.constant 0 : index
    %33 = vector.load %arg5[%c1_32, %c0_33, %c0_34] : memref<3x8x8xf32, #tpu.memory_space<vmem>>, vector<1x8x8xf32>
    %34 = vector.shape_cast %33 : vector<1x8x8xf32> to vector<8x8xf32>
    %c0_35 = arith.constant 0 : index
    %c2_36 = arith.constant 2 : index
    %35 = vector.load %arg11[%c0_35, %c2_36] : memref<8x20xf32, #tpu.memory_space<vmem>>, vector<8x16xf32>
    %cst_37 = arith.constant dense<0.000000e+00> : vector<8x16xf32>
    %36 = tpu.matmul %34, %35, %cst_37 {dimension_numbers = #tpu.dot_dimension_numbers<[1], [0], [0], [1], [0, 0, 1, 1], [], []>} : vector<8x8xf32>, vector<8x16xf32>, vector<8x16xf32> -> vector<8x16xf32>
    %37 = arith.addf %32, %36 : vector<8x16xf32>
    %c2_38 = arith.constant 2 : index
    %c0_39 = arith.constant 0 : index
    %c0_40 = arith.constant 0 : index
    %38 = vector.load %arg5[%c2_38, %c0_39, %c0_40] : memref<3x8x8xf32, #tpu.memory_space<vmem>>, vector<1x8x8xf32>
    %39 = vector.shape_cast %38 : vector<1x8x8xf32> to vector<8x8xf32>
    %c0_41 = arith.constant 0 : index
    %c4_42 = arith.constant 4 : index
    %40 = vector.load %arg11[%c0_41, %c4_42] : memref<8x20xf32, #tpu.memory_space<vmem>>, vector<8x16xf32>
    %cst_43 = arith.constant dense<0.000000e+00> : vector<8x16xf32>
    %41 = tpu.matmul %39, %40, %cst_43 {dimension_numbers = #tpu.dot_dimension_numbers<[1], [0], [0], [1], [0, 0, 1, 1], [], []>} : vector<8x8xf32>, vector<8x16xf32>, vector<8x16xf32> -> vector<8x16xf32>
    %42 = arith.addf %37, %41 : vector<8x16xf32>
    %c0_44 = arith.constant 0 : index
    %c0_45 = arith.constant 0 : index
    %43 = vector.load %arg6[%c0_44, %c0_45] : memref<8x1xf32, #tpu.memory_space<vmem>>, vector<8x1xf32>
    %44 = vector.broadcast %43 : vector<8x1xf32> to vector<8x16xf32>
    %45 = arith.addf %42, %44 : vector<8x16xf32>
    %cst_46 = arith.constant 0.000000e+00 : f32
    %46 = vector.broadcast %cst_46 : f32 to vector<8x16xf32>
    %47 = arith.maximumf %45, %46 : vector<8x16xf32>
    %c0_47 = arith.constant 0 : index
    %c0_48 = arith.constant 0 : index
    %48 = vector.load %arg7[%c0_47, %c0_48] : memref<8x4xf32, #tpu.memory_space<vmem>>, vector<8x4xf32>
    %cst_49 = arith.constant dense<0.000000e+00> : vector<8x16xf32>
    %49 = tpu.matmul %48, %7, %cst_49 {dimension_numbers = #tpu.dot_dimension_numbers<[1], [0], [0], [1], [0, 0, 1, 1], [], []>} : vector<8x4xf32>, vector<4x16xf32>, vector<8x16xf32> -> vector<8x16xf32>
    %c0_50 = arith.constant 0 : index
    %c0_51 = arith.constant 0 : index
    %50 = vector.load %arg8[%c0_50, %c0_51] : memref<8x1xf32, #tpu.memory_space<vmem>>, vector<8x1xf32>
    %51 = vector.broadcast %50 : vector<8x1xf32> to vector<8x16xf32>
    %52 = arith.addf %49, %51 : vector<8x16xf32>
    %53 = arith.addf %47, %52 : vector<8x16xf32>
    %cst_52 = arith.constant 0.000000e+00 : f32
    %54 = vector.broadcast %cst_52 : f32 to vector<8x16xf32>
    %55 = arith.maximumf %53, %54 : vector<8x16xf32>
    %c0_53 = arith.constant 0 : index
    %c0_54 = arith.constant 0 : index
    %c0_55 = arith.constant 0 : index
    %56 = vector.load %arg9[%c0_53, %c0_54, %c0_55] : memref<1x8x16xf32, #tpu.memory_space<vmem>>, vector<1x8x16xf32>
    %57 = vector.shape_cast %56 : vector<1x8x16xf32> to vector<8x16xf32>
    %58 = vector.shape_cast %55 : vector<8x16xf32> to vector<1x8x16xf32>
    tpu.vector_store %arg9[%c0_53, %c0_54, %c0_55], %58 {strides = array<i32>} : memref<1x8x16xf32, #tpu.memory_space<vmem>>, vector<1x8x16xf32>,
    return
  }
  func.func @transform_0(%arg0: i32, %arg1: i32) -> (i32, i32, i32) {
    %c0_i32 = arith.constant 0 : i32
    %c0_i32_0 = arith.constant 0 : i32
    return %arg0, %c0_i32, %arg1 : i32, i32, i32
  }
  func.func @transform_1(%arg0: i32, %arg1: i32) -> (i32, i32, i32) {
    %c0_i32 = arith.constant 0 : i32
    %c0_i32_0 = arith.constant 0 : i32
    %c0_i32_1 = arith.constant 0 : i32
    %c0_i32_2 = arith.constant 0 : i32
    return %c0_i32, %c0_i32_0, %c0_i32_1 : i32, i32, i32
  }
  func.func @transform_2(%arg0: i32, %arg1: i32) -> (i32, i32) {
    %c0_i32 = arith.constant 0 : i32
    %c0_i32_0 = arith.constant 0 : i32
    %c0_i32_1 = arith.constant 0 : i32
    return %c0_i32, %c0_i32_0 : i32, i32
  }
  func.func @transform_3(%arg0: i32, %arg1: i32) -> (i32, i32, i32) {
    %c0_i32 = arith.constant 0 : i32
    %c0_i32_0 = arith.constant 0 : i32
    %c0_i32_1 = arith.constant 0 : i32
    %c0_i32_2 = arith.constant 0 : i32
    return %c0_i32, %c0_i32_0, %c0_i32_1 : i32, i32, i32
  }
  func.func @transform_4(%arg0: i32, %arg1: i32) -> (i32, i32) {
    %c0_i32 = arith.constant 0 : i32
    %c0_i32_0 = arith.constant 0 : i32
    %c0_i32_1 = arith.constant 0 : i32
    return %c0_i32, %c0_i32_0 : i32, i32
  }
  func.func @transform_5(%arg0: i32, %arg1: i32) -> (i32, i32) {
    %c0_i32 = arith.constant 0 : i32
    %c0_i32_0 = arith.constant 0 : i32
    %c0_i32_1 = arith.constant 0 : i32
    return %c0_i32, %c0_i32_0 : i32, i32
  }
  func.func @transform_6(%arg0: i32, %arg1: i32) -> (i32, i32) {
    %c0_i32 = arith.constant 0 : i32
    %c0_i32_0 = arith.constant 0 : i32
    %c0_i32_1 = arith.constant 0 : i32
    return %c0_i32, %c0_i32_0 : i32, i32
  }
  func.func @transform_7(%arg0: i32, %arg1: i32) -> (i32, i32, i32) {
    %c0_i32 = arith.constant 0 : i32
    %c0_i32_0 = arith.constant 0 : i32
    return %arg0, %c0_i32, %arg1 : i32, i32, i32
  }
}

</mosaic_0001>

<llo_original>
// kernel: tpu_custom_call.1
$region0: #{tpu_custom_call.1}
  #allocation0 [shape = 'u32[]', space=smem, size = 0x4, offset = 0x4, fixed_abs, tag = 'smem constant byte address 0x4 - core index']
  #allocation1 [shape = 'u32[144,128]{1,0:T(1,128)}', space=vmem, size = 0x12000, scoped, tag = 'internal scratch']
  #allocation2 [shape = 'f32[4,20]{1,0:T(4,128)}', space=vmem, size = 0x800, scoped, tag = 'scratch operand']
  #allocation3 [shape = 'f32[8,20]{1,0:T(8,128)}', space=vmem, size = 0x1000, scoped, tag = 'scratch operand']
  %s0 = inlined_call_operand.vmem [shape: f32[2,4,16], index: 0, kind: input, shape index: {}]
  %s1 = inlined_call_operand.vmem [shape: f32[3,8,4], index: 1, kind: input, shape index: {}]
  %s2 = inlined_call_operand.vmem [shape: f32[8,1], index: 2, kind: input, shape index: {}]
  %s3 = inlined_call_operand.vmem [shape: f32[3,8,8], index: 3, kind: input, shape index: {}]
  %s4 = inlined_call_operand.vmem [shape: f32[8,1], index: 4, kind: input, shape index: {}]
  %s5 = inlined_call_operand.vmem [shape: f32[8,4], index: 5, kind: input, shape index: {}]
  %s6 = inlined_call_operand.vmem [shape: f32[8,1], index: 6, kind: input, shape index: {}]
  %s7 = inlined_call_operand.hbm [shape: f32[2,8,16], index: 7, kind: output, shape index: {}]
  %s8 = sld [smem:[#allocation0]]
  $region69: #{tpu_custom_call.1} parent=0
    _
  %s10 = ssub.s32 1, %s8
  %s11 = scalar_select 0, %s10, %s8
  $region1: #{tpu_custom_call.1} parent=0
    #allocation4 [shape = 'u8[8192]{0}', space=vmem, size = 0x2000, scoped, tag = 'output window, operand 0']
    #allocation5 [shape = 's32[2]{0}', space=sflag, size = 0x8, scoped, tag = 'scoped memory for tpu_custom_call.1']
    %12 = vsyncpa [#allocation5], 0
    %s13 = scalar_lea.sflag [#allocation5], 1
    %14 = vsyncpa %s13, 0
    loop: start=0, step=1, limit=4
    $region2: #{tpu_custom_call.1} parent=1 // loop_pre_header
      _
    $region3: #{tpu_custom_call.1} parent=1 // loop_header
      %s16 = sphi 0, %s20
      %p17 = scmp.ge.s32.totalorder %s16, 4
      %s23 = sphi 0, %s35
      %s24 = sphi 0, %s31
      %s25 = sphi 0, %s23
      %s26 = sphi 0, %s24
      %s27 = sphi 0, %s25
      %s28 = sphi 0, %s26
      %s40 = sphi 0, %s42
      %s43 = sphi 0, %s40
      %s44 = sphi 0, %s43
      %s60 = sphi 0, %s44
      %s64 = sphi 0, %s64
      %s66 = sphi 0, %s64
      %s67 = sphi 0, %s66
      %s81 = sphi 0, %s67
      %s85 = sphi 0, %s85
      %s87 = sphi 0, %s85
      %s88 = sphi 0, %s87
      %s102 = sphi 0, %s88
      %s106 = sphi 0, %s106
      %s108 = sphi 0, %s106
      %s109 = sphi 0, %s108
      %s123 = sphi 0, %s109
      %s127 = sphi 0, %s127
      %s129 = sphi 0, %s127
      %s130 = sphi 0, %s129
      %s144 = sphi 0, %s130
      %s148 = sphi 0, %s148
      %s150 = sphi 0, %s148
      %s151 = sphi 0, %s150
      %s165 = sphi 0, %s151
      %s169 = sphi 0, %s169
      %s171 = sphi 0, %s169
      %s172 = sphi 0, %s171
      %s186 = sphi 0, %s172
      %s194 = sphi 0, %s196
      %s197 = sphi 0, %s194
      %s198 = sphi 0, %s197
      %s214 = sphi 0, %s198
    $region4: #{tpu_custom_call.1} parent=1 // loop_header_branch
      %19 = sbr.rel (%p17) target = $region8
    $region5: #{tpu_custom_call.1} parent=1 // loop_body
      %s21 = ssub.s32 %s16, 1
      %s22 = ssub.s32 %s16, 2
      %s29 = sadd.s32 1, %s24
      %p30 = scmp.ge.s32.totalorder %s29, 1
      %s31 = scalar_select %p30, 0, %s29
      %s32 = sadd.s32 1, %s23
      %s33 = scalar_select %p30, %s32, %s23
      %p34 = scmp.ge.s32.totalorder %s33, 2
      %s35 = scalar_select %p34, 0, %s33
      %s36 = ssub.s32 %s23, %s35
      %s37 = ssub.s32 %s24, %s31
      %s38 = sor.u32 %s36, %s37
      %p39 = scmp.eq.s32.totalorder %s38, 0
      %s41 = sadd.s32 %s40, 1
      %s42 = scalar_select %p39, %s40, %s41
      %p45 = pneg %p39
      %p46 = scmp.eq.s32.totalorder %s16, 1
      %p47 = por %p45, %p46
      %p48 = scmp.ne.s32.totalorder %s40, %s43
      %p49 = scmp.eq.s32.totalorder %s16, 0
      %p50 = por %p48, %p49
      %p51 = scmp.ne.s32.totalorder %s40, %s43
      %p52 = scmp.eq.s32.totalorder %s21, 1
      %p53 = por %p51, %p52
      %p54 = scmp.ne.s32.totalorder %s43, %s44
      %p55 = scmp.eq.s32.totalorder %s21, 0
      %p56 = por %p54, %p55
      %p57 = scmp.ne.s32.totalorder %s43, %s44
      %p58 = scmp.eq.s32.totalorder %s22, 1
      %p59 = por %p57, %p58
      %p61 = scmp.ne.s32.totalorder %s44, %s60
      %p62 = scmp.eq.s32.totalorder %s22, 0
      %p63 = por %p61, %p62
      %s65 = sadd.s32 %s64, 1
      %p68 = scmp.eq.s32.totalorder %s16, 1
      %p69 = scmp.ne.s32.totalorder %s64, %s66
      %p70 = scmp.eq.s32.totalorder %s16, 0
      %p71 = por %p69, %p70
      %p72 = scmp.ne.s32.totalorder %s64, %s66
      %p73 = scmp.eq.s32.totalorder %s21, 1
      %p74 = por %p72, %p73
      %p75 = scmp.ne.s32.totalorder %s66, %s67
      %p76 = scmp.eq.s32.totalorder %s21, 0
      %p77 = por %p75, %p76
      %p78 = scmp.ne.s32.totalorder %s66, %s67
      %p79 = scmp.eq.s32.totalorder %s22, 1
      %p80 = por %p78, %p79
      %p82 = scmp.ne.s32.totalorder %s67, %s81
      %p83 = scmp.eq.s32.totalorder %s22, 0
      %p84 = por %p82, %p83
      %s86 = sadd.s32 %s85, 1
      %p89 = scmp.eq.s32.totalorder %s16, 1
      %p90 = scmp.ne.s32.totalorder %s85, %s87
      %p91 = scmp.eq.s32.totalorder %s16, 0
      %p92 = por %p90, %p91
      %p93 = scmp.ne.s32.totalorder %s85, %s87
      %p94 = scmp.eq.s32.totalorder %s21, 1
      %p95 = por %p93, %p94
      %p96 = scmp.ne.s32.totalorder %s87, %s88
      %p97 = scmp.eq.s32.totalorder %s21, 0
      %p98 = por %p96, %p97
      %p99 = scmp.ne.s32.totalorder %s87, %s88
      %p100 = scmp.eq.s32.totalorder %s22, 1
      %p101 = por %p99, %p100
      %p103 = scmp.ne.s32.totalorder %s88, %s102
      %p104 = scmp.eq.s32.totalorder %s22, 0
      %p105 = por %p103, %p104
      %s107 = sadd.s32 %s106, 1
      %p110 = scmp.eq.s32.totalorder %s16, 1
      %p111 = scmp.ne.s32.totalorder %s106, %s108
      %p112 = scmp.eq.s32.totalorder %s16, 0
      %p113 = por %p111, %p112
      %p114 = scmp.ne.s32.totalorder %s106, %s108
      %p115 = scmp.eq.s32.totalorder %s21, 1
      %p116 = por %p114, %p115
      %p117 = scmp.ne.s32.totalorder %s108, %s109
      %p118 = scmp.eq.s32.totalorder %s21, 0
      %p119 = por %p117, %p118
      %p120 = scmp.ne.s32.totalorder %s108, %s109
      %p121 = scmp.eq.s32.totalorder %s22, 1
      %p122 = por %p120, %p121
      %p124 = scmp.ne.s32.totalorder %s109, %s123
      %p125 = scmp.eq.s32.totalorder %s22, 0
      %p126 = por %p124, %p125
      %s128 = sadd.s32 %s127, 1
      %p131 = scmp.eq.s32.totalorder %s16, 1
      %p132 = scmp.ne.s32.totalorder %s127, %s129
      %p133 = scmp.eq.s32.totalorder %s16, 0
      %p134 = por %p132, %p133
      %p135 = scmp.ne.s32.totalorder %s127, %s129
      %p136 = scmp.eq.s32.totalorder %s21, 1
      %p137 = por %p135, %p136
      %p138 = scmp.ne.s32.totalorder %s129, %s130
      %p139 = scmp.eq.s32.totalorder %s21, 0
      %p140 = por %p138, %p139
      %p141 = scmp.ne.s32.totalorder %s129, %s130
      %p142 = scmp.eq.s32.totalorder %s22, 1
      %p143 = por %p141, %p142
      %p145 = scmp.ne.s32.totalorder %s130, %s144
      %p146 = scmp.eq.s32.totalorder %s22, 0
      %p147 = por %p145, %p146
      %s149 = sadd.s32 %s148, 1
      %p152 = scmp.eq.s32.totalorder %s16, 1
      %p153 = scmp.ne.s32.totalorder %s148, %s150
      %p154 = scmp.eq.s32.totalorder %s16, 0
      %p155 = por %p153, %p154
      %p156 = scmp.ne.s32.totalorder %s148, %s150
      %p157 = scmp.eq.s32.totalorder %s21, 1
      %p158 = por %p156, %p157
      %p159 = scmp.ne.s32.totalorder %s150, %s151
      %p160 = scmp.eq.s32.totalorder %s21, 0
      %p161 = por %p159, %p160
      %p162 = scmp.ne.s32.totalorder %s150, %s151
      %p163 = scmp.eq.s32.totalorder %s22, 1
      %p164 = por %p162, %p163
      %p166 = scmp.ne.s32.totalorder %s151, %s165
      %p167 = scmp.eq.s32.totalorder %s22, 0
      %p168 = por %p166, %p167
      %s170 = sadd.s32 %s169, 1
      %p173 = scmp.eq.s32.totalorder %s16, 1
      %p174 = scmp.ne.s32.totalorder %s169, %s171
      %p175 = scmp.eq.s32.totalorder %s16, 0
      %p176 = por %p174, %p175
      %p177 = scmp.ne.s32.totalorder %s169, %s171
      %p178 = scmp.eq.s32.totalorder %s21, 1
      %p179 = por %p177, %p178
      %p180 = scmp.ne.s32.totalorder %s171, %s172
      %p181 = scmp.eq.s32.totalorder %s21, 0
      %p182 = por %p180, %p181
      %p183 = scmp.ne.s32.totalorder %s171, %s172
      %p184 = scmp.eq.s32.totalorder %s22, 1
      %p185 = por %p183, %p184
      %p187 = scmp.ne.s32.totalorder %s172, %s186
      %p188 = scmp.eq.s32.totalorder %s22, 0
      %p189 = por %p187, %p188
      %s190 = ssub.s32 %s23, %s35
      %s191 = ssub.s32 %s24, %s31
      %s192 = sor.u32 %s190, %s191
      %p193 = scmp.eq.s32.totalorder %s192, 0
      %s195 = sadd.s32 %s194, 1
      %s196 = scalar_select %p193, %s194, %s195
      %p199 = pneg %p193
      %p200 = scmp.eq.s32.totalorder %s16, 1
      %p201 = por %p199, %p200
      %p202 = scmp.ne.s32.totalorder %s194, %s197
      %p203 = scmp.eq.s32.totalorder %s16, 0
      %p204 = por %p202, %p203
      %p205 = scmp.ne.s32.totalorder %s194, %s197
      %p206 = scmp.eq.s32.totalorder %s21, 1
      %p207 = por %p205, %p206
      %p208 = scmp.ne.s32.totalorder %s197, %s198
      %p209 = scmp.eq.s32.totalorder %s21, 0
      %p210 = por %p208, %p209
      %p211 = scmp.ne.s32.totalorder %s197, %s198
      %p212 = scmp.eq.s32.totalorder %s22, 1
      %p213 = por %p211, %p212
      %p215 = scmp.ne.s32.totalorder %s198, %s214
      %p216 = scmp.eq.s32.totalorder %s22, 0
      %p217 = por %p215, %p216
      %p218 = scmp.le.s32.totalorder 1, %s16
      %p219 = scmp.lt.s32.totalorder %s16, 3
      %p220 = pnand %p218, %p219
      %p221 = pneg %p220
      // Predicated region
      $region9: #{tpu_custom_call.1} parent=5 // pred_check
        _
      $region10: #{tpu_custom_call.1} parent=5 // pred_check_branch
        %223 = sbr.rel (%p220) target = $region12
      $region11: #{tpu_custom_call.1} parent=5 // pred_region
        %s224 = ssub.s32 %s16, 1
        // Predicated region
        $region13: #{tpu_custom_call.1} parent=11 // pred_check
          %p225 = pneg %p77
        $region14: #{tpu_custom_call.1} parent=11 // pred_check_branch
          %227 = sbr.rel (%p225) target = $region16
        $region15: #{tpu_custom_call.1} parent=11 // pred_region
          _
        $region16: #{tpu_custom_call.1} parent=11 // pred_fallthru
          _
        // Predicated region
        $region17: #{tpu_custom_call.1} parent=11 // pred_check
          %p228 = pneg %p98
        $region18: #{tpu_custom_call.1} parent=11 // pred_check_branch
          %230 = sbr.rel (%p228) target = $region20
        $region19: #{tpu_custom_call.1} parent=11 // pred_region
          _
        $region20: #{tpu_custom_call.1} parent=11 // pred_fallthru
          _
        // Predicated region
        $region21: #{tpu_custom_call.1} parent=11 // pred_check
          %p231 = pneg %p119
        $region22: #{tpu_custom_call.1} parent=11 // pred_check_branch
          %233 = sbr.rel (%p231) target = $region24
        $region23: #{tpu_custom_call.1} parent=11 // pred_region
          _
        $region24: #{tpu_custom_call.1} parent=11 // pred_fallthru
          _
        // Predicated region
        $region25: #{tpu_custom_call.1} parent=11 // pred_check
          %p234 = pneg %p140
        $region26: #{tpu_custom_call.1} parent=11 // pred_check_branch
          %236 = sbr.rel (%p234) target = $region28
        $region27: #{tpu_custom_call.1} parent=11 // pred_region
          _
        $region28: #{tpu_custom_call.1} parent=11 // pred_fallthru
          _
        // Predicated region
        $region29: #{tpu_custom_call.1} parent=11 // pred_check
          %p237 = pneg %p161
        $region30: #{tpu_custom_call.1} parent=11 // pred_check_branch
          %239 = sbr.rel (%p237) target = $region32
        $region31: #{tpu_custom_call.1} parent=11 // pred_region
          _
        $region32: #{tpu_custom_call.1} parent=11 // pred_fallthru
          _
        // Predicated region
        $region33: #{tpu_custom_call.1} parent=11 // pred_check
          %p240 = pneg %p182
        $region34: #{tpu_custom_call.1} parent=11 // pred_check_branch
          %242 = sbr.rel (%p240) target = $region36
        $region35: #{tpu_custom_call.1} parent=11 // pred_region
          _
        $region36: #{tpu_custom_call.1} parent=11 // pred_fallthru
          _
      $region12: #{tpu_custom_call.1} parent=5 // pred_fallthru
        _
      %p243 = scmp.lt.s32.totalorder %s16, 2
      // Predicated region
      $region37: #{tpu_custom_call.1} parent=5 // pred_check
        %p244 = pneg %p243
      $region38: #{tpu_custom_call.1} parent=5 // pred_check_branch
        %246 = sbr.rel (%p244) target = $region40
      $region39: #{tpu_custom_call.1} parent=5 // pred_region
        // Predicated region
        $region41: #{tpu_custom_call.1} parent=39 // pred_check
          %p247 = pneg %p50
        $region42: #{tpu_custom_call.1} parent=39 // pred_check_branch
          %249 = sbr.rel (%p247) target = $region44
        $region43: #{tpu_custom_call.1} parent=39 // pred_region
          %p250 = scmp.lt.s32.totalorder %s23, 1
          %s251 = scalar_select %p250, %s23, 1
          %p252 = scmp.lt.s32.totalorder %s24, 0
          %s253 = scalar_select %p252, %s24, 0
          %s254 = sadd.s32 %s253, %s251
          %s255 = smul.addr %s254, 4
          %s256 = scalar_lea.vmem %s0, %s255
        $region44: #{tpu_custom_call.1} parent=39 // pred_fallthru
          _
      $region40: #{tpu_custom_call.1} parent=5 // pred_fallthru
        _
      %p257 = scmp.le.s32.totalorder 1, %s16
      %p258 = scmp.lt.s32.totalorder %s16, 3
      %p259 = pnand %p257, %p258
      %p260 = pneg %p259
      // Predicated region
      $region45: #{tpu_custom_call.1} parent=5 // pred_check
        _
      $region46: #{tpu_custom_call.1} parent=5 // pred_check_branch
        %262 = sbr.rel (%p259) target = $region48
      $region47: #{tpu_custom_call.1} parent=5 // pred_region
        %s263 = ssub.s32 %s16, 1
        %p264 = scmp.lt.s32.totalorder %s25, 1
        %s265 = scalar_select %p264, %s25, 1
        %p266 = scmp.lt.s32.totalorder %s26, 0
        %s267 = scalar_select %p266, %s26, 0
        %s268 = sadd.s32 %s267, %s265
        %s269 = smul.addr %s268, 4
        %s270 = scalar_lea.vmem %s0, %s269
        %p271 = pneg %p56
        %p272 = pneg %p53
        %p273 = pneg %p77
        %p274 = pneg %p74
        %p275 = pneg %p98
        %p276 = pneg %p95
        %p277 = pneg %p119
        %p278 = pneg %p116
        %p279 = pneg %p140
        %p280 = pneg %p137
        %p281 = pneg %p161
        %p282 = pneg %p158
        %p283 = pneg %p182
        %p284 = pneg %p179
        %p285 = pneg %p210
        %p286 = pneg %p207
        %s287 = sand.u32 %s197, 1
        %s288 = scalar_lea.sflag [#allocation5], %s287
        %s289 = sand.u32 %s197, 1
        %s290 = smul.addr %s289, 8
        %s291 = scalar_lea.vmem [#allocation4], %s290
        %p292 = scmp.lt.s32.totalorder %s25, 1
        %s293 = scalar_select %p292, %s25, 1
        %p294 = scmp.lt.s32.totalorder %s26, 0
        %s295 = scalar_select %p294, %s26, 0
        %s296 = sadd.s32 %s295, %s293
        %s297 = smul.addr %s296, 4
        %s298 = scalar_lea.vmem %s0, %s297
        %p299 = scmp.eq.s32.totalorder %s26, 0
        // Predicated region
        $region49: #{tpu_custom_call.1} parent=47 // pred_check
          %p300 = pneg %p299
        $region50: #{tpu_custom_call.1} parent=47 // pred_check_branch
          %302 = sbr.rel (%p300) target = $region52
        $region51: #{tpu_custom_call.1} parent=47 // pred_region
          %vm303 = vcmask 27648
          %304 = vst.msk [vmem:[#allocation2] sm:$0xf] %vm303, 0.0
          %vm305 = vcmask 31744
          %306 = vst.msk [vmem:[#allocation3] sm:$0xff] %vm305, 0.0
        $region52: #{tpu_custom_call.1} parent=47 // pred_fallthru
          _
        %p307 = scmp.gt.s32.totalorder %s26, 0
        // Predicated region
        $region53: #{tpu_custom_call.1} parent=47 // pred_check
          %p308 = pneg %p307
        $region54: #{tpu_custom_call.1} parent=47 // pred_check_branch
          %310 = sbr.rel (%p308) target = $region56
        $region55: #{tpu_custom_call.1} parent=47 // pred_region
          %v311 = vld [vmem:[#allocation2] sm:$0xf]
          %v312 = vld [vmem:[#allocation3] sm:$0xff]
          %314 = vrot.lane.b32.xlu0 %v311, 112
          %v315 = vpop.permute.xlu0 %314
          %vm317 = vcmask 27648
          %318 = vst.msk [vmem:[#allocation2] sm:$0xf] %vm317, %v315
          %320 = vrot.lane.b32.xlu0 %v312, 112
          %v321 = vpop.permute.xlu0 %320
          %vm323 = vcmask 31744
          %324 = vst.msk [vmem:[#allocation3] sm:$0xff] %vm323, %v321
        $region56: #{tpu_custom_call.1} parent=47 // pred_fallthru
          _
        %v325 = vld [vmem:[%s298] sm:$0xf]
        %327 = vrot.lane.b32.xlu0 %v325, 4
        %v328 = vpop.permute.xlu0 %327
        %vm330 = vcmask 158752
        %331 = vst.msk [vmem:[#allocation2] sm:$0xf] %vm330, %v328
        %v332 = vld [vmem:[%s1] sm:$0xff]
        %v333 = vld [vmem:[#allocation2] sm:$0xf]
        %s334 = scalar_lea.vmem %s1, 8
        %v335 = vld [vmem:[%s334] sm:$0xff]
        %337 = vrot.lane.b32.xlu0 %v333, 126
        %v338 = vpop.permute.xlu0 %337
        %vm339 = vcmask 31744
        %v341 = vsel %vm339, %v335, 0
        %vm343 = vcmask 1043456
        %v344 = vsel %vm343, %v338, 0
        %346 = vmatprep.subr.mxu0 0.0
        %347 = vmatpush1.msra.mxu0 0.0
        %348 = vmatprep.subr.mxu0 0.0
        %349 = vmatpush1.msra.mxu0 0.0
        %350 = vmatprep.subr.mxu0 0.0
        %351 = vmatpush1.msra.mxu0 0.0
        %352 = vmatprep.subr.mxu0 0.0
        %353 = vmatpush1.msra.mxu0 0.0
        %354 = vmatprep.subr.mxu0 0.0
        %355 = vmatpush1.msra.mxu0 0.0
        %356 = vmatprep.subr.mxu0 0.0
        %357 = vmatpush1.msra.mxu0 0.0
        %358 = vmatprep.subr.mxu0 0.0
        %359 = vmatpush1.msra.mxu0 0.0
        %360 = vmatprep.subr.mxu0 0.0
        %361 = vmatpush1.msra.mxu0 0.0
        %362 = vmatprep.subr.mxu0 0.0
        %363 = vmatpush1.msra.mxu0 0.0
        %364 = vmatprep.subr.mxu0 0.0
        %365 = vmatpush1.msra.mxu0 0.0
        %366 = vmatprep.subr.mxu0 0.0
        %367 = vmatpush1.msra.mxu0 0.0
        %368 = vmatprep.subr.mxu0 0.0
        %369 = vmatpush1.msra.mxu0 0.0
        %370 = vmatprep.subr.mxu0 0.0
        %371 = vmatpush1.msra.mxu0 0.0
        %372 = vmatprep.subr.mxu0 0.0
        %373 = vmatpush1.msra.mxu0 0.0
        %374 = vmatprep.subr.mxu0 0.0
        %375 = vmatpush1.msra.mxu0 0.0
        %376 = vmatprep.subr.mxu0 0.0
        %377 = vmatpush1.msra.mxu0 %v344
        %378 = vmatprep.subr.mxu0 0.0
        %379 = vmatpush2.msra.mxu0 0.0
        %380 = vmatprep.subr.mxu0 0.0
        %381 = vmatpush2.msra.mxu0 0.0
        %382 = vmatprep.subr.mxu0 0.0
        %383 = vmatpush2.msra.mxu0 0.0
        %384 = vmatprep.subr.mxu0 0.0
        %385 = vmatpush2.msra.mxu0 0.0
        %386 = vmatprep.subr.mxu0 0.0
        %387 = vmatpush2.msra.mxu0 0.0
        %388 = vmatprep.subr.mxu0 0.0
        %389 = vmatpush2.msra.mxu0 0.0
        %390 = vmatprep.subr.mxu0 0.0
        %391 = vmatpush2.msra.mxu0 0.0
        %392 = vmatprep.subr.mxu0 0.0
        %393 = vmatpush2.msra.mxu0 0.0
        %394 = vmatprep.subr.mxu0 0.0
        %395 = vmatpush2.msra.mxu0 0.0
        %396 = vmatprep.subr.mxu0 0.0
        %397 = vmatpush2.msra.mxu0 0.0
        %398 = vmatprep.subr.mxu0 0.0
        %399 = vmatpush2.msra.mxu0 0.0
        %400 = vmatprep.subr.mxu0 0.0
        %401 = vmatpush2.msra.mxu0 0.0
        %402 = vmatprep.subr.mxu0 0.0
        %403 = vmatpush2.msra.mxu0 0.0
        %404 = vmatprep.subr.mxu0 0.0
        %405 = vmatpush2.msra.mxu0 0.0
        %406 = vmatprep.subr.mxu0 0.0
        %407 = vmatpush2.msra.mxu0 0.0
        %408 = vmatprep.subr.mxu0 0.0
        %409 = vmatpush2.msra.mxu0 0.0
        %410 = vmatprep.mubr.f32.mxu0 0.0
        %411 = vmatmul.mubr.f32.gmra.mxu0 %v341
        %v412 = vpop.f32.mrf.mxu0
        %v413 = vadd.f32 0.0, %v412
        %v414 = vpop.f32.mrf.mxu0
        %415 = vdwg.mxu0
        %v417 = vsel %vm339, %v332, 0
        %v419 = vsel %vm343, %v333, 0
        %421 = vmatprep.subr.mxu0 0.0
        %422 = vmatpush1.msra.mxu0 0.0
        %423 = vmatprep.subr.mxu0 0.0
        %424 = vmatpush1.msra.mxu0 0.0
        %425 = vmatprep.subr.mxu0 0.0
        %426 = vmatpush1.msra.mxu0 0.0
        %427 = vmatprep.subr.mxu0 0.0
        %428 = vmatpush1.msra.mxu0 0.0
        %429 = vmatprep.subr.mxu0 0.0
        %430 = vmatpush1.msra.mxu0 0.0
        %431 = vmatprep.subr.mxu0 0.0
        %432 = vmatpush1.msra.mxu0 0.0
        %433 = vmatprep.subr.mxu0 0.0
        %434 = vmatpush1.msra.mxu0 0.0
        %435 = vmatprep.subr.mxu0 0.0
        %436 = vmatpush1.msra.mxu0 0.0
        %437 = vmatprep.subr.mxu0 0.0
        %438 = vmatpush1.msra.mxu0 0.0
        %439 = vmatprep.subr.mxu0 0.0
        %440 = vmatpush1.msra.mxu0 0.0
        %441 = vmatprep.subr.mxu0 0.0
        %442 = vmatpush1.msra.mxu0 0.0
        %443 = vmatprep.subr.mxu0 0.0
        %444 = vmatpush1.msra.mxu0 0.0
        %445 = vmatprep.subr.mxu0 0.0
        %446 = vmatpush1.msra.mxu0 0.0
        %447 = vmatprep.subr.mxu0 0.0
        %448 = vmatpush1.msra.mxu0 0.0
        %449 = vmatprep.subr.mxu0 0.0
        %450 = vmatpush1.msra.mxu0 0.0
        %451 = vmatprep.subr.mxu0 0.0
        %452 = vmatpush1.msra.mxu0 %v419
        %453 = vmatprep.subr.mxu0 0.0
        %454 = vmatpush2.msra.mxu0 0.0
        %455 = vmatprep.subr.mxu0 0.0
        %456 = vmatpush2.msra.mxu0 0.0
        %457 = vmatprep.subr.mxu0 0.0
        %458 = vmatpush2.msra.mxu0 0.0
        %459 = vmatprep.subr.mxu0 0.0
        %460 = vmatpush2.msra.mxu0 0.0
        %461 = vmatprep.subr.mxu0 0.0
        %462 = vmatpush2.msra.mxu0 0.0
        %463 = vmatprep.subr.mxu0 0.0
        %464 = vmatpush2.msra.mxu0 0.0
        %465 = vmatprep.subr.mxu0 0.0
        %466 = vmatpush2.msra.mxu0 0.0
        %467 = vmatprep.subr.mxu0 0.0
        %468 = vmatpush2.msra.mxu0 0.0
        %469 = vmatprep.subr.mxu0 0.0
        %470 = vmatpush2.msra.mxu0 0.0
        %471 = vmatprep.subr.mxu0 0.0
        %472 = vmatpush2.msra.mxu0 0.0
        %473 = vmatprep.subr.mxu0 0.0
        %474 = vmatpush2.msra.mxu0 0.0
        %475 = vmatprep.subr.mxu0 0.0
        %476 = vmatpush2.msra.mxu0 0.0
        %477 = vmatprep.subr.mxu0 0.0
        %478 = vmatpush2.msra.mxu0 0.0
        %479 = vmatprep.subr.mxu0 0.0
        %480 = vmatpush2.msra.mxu0 0.0
        %481 = vmatprep.subr.mxu0 0.0
        %482 = vmatpush2.msra.mxu0 0.0
        %483 = vmatprep.subr.mxu0 0.0
        %484 = vmatpush2.msra.mxu0 0.0
        %485 = vmatprep.mubr.f32.mxu0 0.0
        %486 = vmatmul.mubr.f32.gmra.mxu0 %v417
        %v487 = vpop.f32.mrf.mxu0
        %v488 = vadd.f32 %v413, %v487
        %v489 = vpop.f32.mrf.mxu0
        %490 = vdwg.mxu0
        %s491 = scalar_lea.vmem %s1, 16
        %v492 = vld [vmem:[%s491] sm:$0xff]
        %493 = vrot.lane.b32.xlu0 %v333, 124
        %v494 = vpop.permute.xlu0 %493
        %v496 = vsel %vm339, %v492, 0
        %v498 = vsel %vm343, %v494, 0
        %500 = vmatprep.subr.mxu0 0.0
        %501 = vmatpush1.msra.mxu0 0.0
        %502 = vmatprep.subr.mxu0 0.0
        %503 = vmatpush1.msra.mxu0 0.0
        %504 = vmatprep.subr.mxu0 0.0
        %505 = vmatpush1.msra.mxu0 0.0
        %506 = vmatprep.subr.mxu0 0.0
        %507 = vmatpush1.msra.mxu0 0.0
        %508 = vmatprep.subr.mxu0 0.0
        %509 = vmatpush1.msra.mxu0 0.0
        %510 = vmatprep.subr.mxu0 0.0
        %511 = vmatpush1.msra.mxu0 0.0
        %512 = vmatprep.subr.mxu0 0.0
        %513 = vmatpush1.msra.mxu0 0.0
        %514 = vmatprep.subr.mxu0 0.0
        %515 = vmatpush1.msra.mxu0 0.0
        %516 = vmatprep.subr.mxu0 0.0
        %517 = vmatpush1.msra.mxu0 0.0
        %518 = vmatprep.subr.mxu0 0.0
        %519 = vmatpush1.msra.mxu0 0.0
        %520 = vmatprep.subr.mxu0 0.0
        %521 = vmatpush1.msra.mxu0 0.0
        %522 = vmatprep.subr.mxu0 0.0
        %523 = vmatpush1.msra.mxu0 0.0
        %524 = vmatprep.subr.mxu0 0.0
        %525 = vmatpush1.msra.mxu0 0.0
        %526 = vmatprep.subr.mxu0 0.0
        %527 = vmatpush1.msra.mxu0 0.0
        %528 = vmatprep.subr.mxu0 0.0
        %529 = vmatpush1.msra.mxu0 0.0
        %530 = vmatprep.subr.mxu0 0.0
        %531 = vmatpush1.msra.mxu0 %v498
        %532 = vmatprep.subr.mxu0 0.0
        %533 = vmatpush2.msra.mxu0 0.0
        %534 = vmatprep.subr.mxu0 0.0
        %535 = vmatpush2.msra.mxu0 0.0
        %536 = vmatprep.subr.mxu0 0.0
        %537 = vmatpush2.msra.mxu0 0.0
        %538 = vmatprep.subr.mxu0 0.0
        %539 = vmatpush2.msra.mxu0 0.0
        %540 = vmatprep.subr.mxu0 0.0
        %541 = vmatpush2.msra.mxu0 0.0
        %542 = vmatprep.subr.mxu0 0.0
        %543 = vmatpush2.msra.mxu0 0.0
        %544 = vmatprep.subr.mxu0 0.0
        %545 = vmatpush2.msra.mxu0 0.0
        %546 = vmatprep.subr.mxu0 0.0
        %547 = vmatpush2.msra.mxu0 0.0
        %548 = vmatprep.subr.mxu0 0.0
        %549 = vmatpush2.msra.mxu0 0.0
        %550 = vmatprep.subr.mxu0 0.0
        %551 = vmatpush2.msra.mxu0 0.0
        %552 = vmatprep.subr.mxu0 0.0
        %553 = vmatpush2.msra.mxu0 0.0
        %554 = vmatprep.subr.mxu0 0.0
        %555 = vmatpush2.msra.mxu0 0.0
        %556 = vmatprep.subr.mxu0 0.0
        %557 = vmatpush2.msra.mxu0 0.0
        %558 = vmatprep.subr.mxu0 0.0
        %559 = vmatpush2.msra.mxu0 0.0
        %560 = vmatprep.subr.mxu0 0.0
        %561 = vmatpush2.msra.mxu0 0.0
        %562 = vmatprep.subr.mxu0 0.0
        %563 = vmatpush2.msra.mxu0 0.0
        %564 = vmatprep.mubr.f32.mxu0 0.0
        %565 = vmatmul.mubr.f32.gmra.mxu0 %v496
        %v566 = vpop.f32.mrf.mxu0
        %v567 = vadd.f32 0.0, %v566
        %v568 = vpop.f32.mrf.mxu0
        %569 = vdwg.mxu0
        %v570 = vadd.f32 %v488, %v567
        %v571 = vld [vmem:[%s2] sm:$0xff]
        %573 = vset.pattern.permute.xlu0 0
        %574 = vperm.xlu0 %573, %v571
        %v575 = vpop.permute.xlu0 %574
        %v577 = vadd.f32 %v570, %v575
        %v578 = vmax.f32 %v577, 0.0
        %580 = vrot.lane.b32.xlu0 %v578, 4
        %v581 = vpop.permute.xlu0 %580
        %vm583 = vcmask 162848
        %584 = vst.msk [vmem:[#allocation3] sm:$0xff] %vm583, %v581
        %v585 = vld [vmem:[%s3] sm:$0xff]
        %v586 = vld [vmem:[#allocation3] sm:$0xff]
        %s587 = scalar_lea.vmem %s3, 8
        %v588 = vld [vmem:[%s587] sm:$0xff]
        %590 = vrot.lane.b32.xlu0 %v586, 126
        %v591 = vpop.permute.xlu0 %590
        %vm593 = vcmask 64512
        %v595 = vsel %vm593, %v588, 0
        %597 = vmatprep.subr.mxu0 0.0
        %598 = vmatpush1.msra.mxu0 0.0
        %599 = vmatprep.subr.mxu0 0.0
        %600 = vmatpush1.msra.mxu0 0.0
        %601 = vmatprep.subr.mxu0 0.0
        %602 = vmatpush1.msra.mxu0 0.0
        %603 = vmatprep.subr.mxu0 0.0
        %604 = vmatpush1.msra.mxu0 0.0
        %605 = vmatprep.subr.mxu0 0.0
        %606 = vmatpush1.msra.mxu0 0.0
        %607 = vmatprep.subr.mxu0 0.0
        %608 = vmatpush1.msra.mxu0 0.0
        %609 = vmatprep.subr.mxu0 0.0
        %610 = vmatpush1.msra.mxu0 0.0
        %611 = vmatprep.subr.mxu0 0.0
        %612 = vmatpush1.msra.mxu0 0.0
        %613 = vmatprep.subr.mxu0 0.0
        %614 = vmatpush1.msra.mxu0 0.0
        %615 = vmatprep.subr.mxu0 0.0
        %616 = vmatpush1.msra.mxu0 0.0
        %617 = vmatprep.subr.mxu0 0.0
        %618 = vmatpush1.msra.mxu0 0.0
        %619 = vmatprep.subr.mxu0 0.0
        %620 = vmatpush1.msra.mxu0 0.0
        %621 = vmatprep.subr.mxu0 0.0
        %622 = vmatpush1.msra.mxu0 0.0
        %623 = vmatprep.subr.mxu0 0.0
        %624 = vmatpush1.msra.mxu0 0.0
        %625 = vmatprep.subr.mxu0 0.0
        %626 = vmatpush1.msra.mxu0 0.0
        %627 = vmatprep.subr.mxu0 0.0
        %628 = vmatpush1.msra.mxu0 %v591
        %629 = vmatprep.subr.mxu0 0.0
        %630 = vmatpush2.msra.mxu0 0.0
        %631 = vmatprep.subr.mxu0 0.0
        %632 = vmatpush2.msra.mxu0 0.0
        %633 = vmatprep.subr.mxu0 0.0
        %634 = vmatpush2.msra.mxu0 0.0
        %635 = vmatprep.subr.mxu0 0.0
        %636 = vmatpush2.msra.mxu0 0.0
        %637 = vmatprep.subr.mxu0 0.0
        %638 = vmatpush2.msra.mxu0 0.0
        %639 = vmatprep.subr.mxu0 0.0
        %640 = vmatpush2.msra.mxu0 0.0
        %641 = vmatprep.subr.mxu0 0.0
        %642 = vmatpush2.msra.mxu0 0.0
        %643 = vmatprep.subr.mxu0 0.0
        %644 = vmatpush2.msra.mxu0 0.0
        %645 = vmatprep.subr.mxu0 0.0
        %646 = vmatpush2.msra.mxu0 0.0
        %647 = vmatprep.subr.mxu0 0.0
        %648 = vmatpush2.msra.mxu0 0.0
        %649 = vmatprep.subr.mxu0 0.0
        %650 = vmatpush2.msra.mxu0 0.0
        %651 = vmatprep.subr.mxu0 0.0
        %652 = vmatpush2.msra.mxu0 0.0
        %653 = vmatprep.subr.mxu0 0.0
        %654 = vmatpush2.msra.mxu0 0.0
        %655 = vmatprep.subr.mxu0 0.0
        %656 = vmatpush2.msra.mxu0 0.0
        %657 = vmatprep.subr.mxu0 0.0
        %658 = vmatpush2.msra.mxu0 0.0
        %659 = vmatprep.subr.mxu0 0.0
        %660 = vmatpush2.msra.mxu0 0.0
        %661 = vmatprep.mubr.f32.mxu0 0.0
        %662 = vmatmul.mubr.f32.gmra.mxu0 %v595
        %v663 = vpop.f32.mrf.mxu0
        %v664 = vadd.f32 0.0, %v663
        %v665 = vpop.f32.mrf.mxu0
        %666 = vdwg.mxu0
        %v668 = vsel %vm593, %v585, 0
        %670 = vmatprep.subr.mxu0 0.0
        %671 = vmatpush1.msra.mxu0 0.0
        %672 = vmatprep.subr.mxu0 0.0
        %673 = vmatpush1.msra.mxu0 0.0
        %674 = vmatprep.subr.mxu0 0.0
        %675 = vmatpush1.msra.mxu0 0.0
        %676 = vmatprep.subr.mxu0 0.0
        %677 = vmatpush1.msra.mxu0 0.0
        %678 = vmatprep.subr.mxu0 0.0
        %679 = vmatpush1.msra.mxu0 0.0
        %680 = vmatprep.subr.mxu0 0.0
        %681 = vmatpush1.msra.mxu0 0.0
        %682 = vmatprep.subr.mxu0 0.0
        %683 = vmatpush1.msra.mxu0 0.0
        %684 = vmatprep.subr.mxu0 0.0
        %685 = vmatpush1.msra.mxu0 0.0
        %686 = vmatprep.subr.mxu0 0.0
        %687 = vmatpush1.msra.mxu0 0.0
        %688 = vmatprep.subr.mxu0 0.0
        %689 = vmatpush1.msra.mxu0 0.0
        %690 = vmatprep.subr.mxu0 0.0
        %691 = vmatpush1.msra.mxu0 0.0
        %692 = vmatprep.subr.mxu0 0.0
        %693 = vmatpush1.msra.mxu0 0.0
        %694 = vmatprep.subr.mxu0 0.0
        %695 = vmatpush1.msra.mxu0 0.0
        %696 = vmatprep.subr.mxu0 0.0
        %697 = vmatpush1.msra.mxu0 0.0
        %698 = vmatprep.subr.mxu0 0.0
        %699 = vmatpush1.msra.mxu0 0.0
        %700 = vmatprep.subr.mxu0 0.0
        %701 = vmatpush1.msra.mxu0 %v586
        %702 = vmatprep.subr.mxu0 0.0
        %703 = vmatpush2.msra.mxu0 0.0
        %704 = vmatprep.subr.mxu0 0.0
        %705 = vmatpush2.msra.mxu0 0.0
        %706 = vmatprep.subr.mxu0 0.0
        %707 = vmatpush2.msra.mxu0 0.0
        %708 = vmatprep.subr.mxu0 0.0
        %709 = vmatpush2.msra.mxu0 0.0
        %710 = vmatprep.subr.mxu0 0.0
        %711 = vmatpush2.msra.mxu0 0.0
        %712 = vmatprep.subr.mxu0 0.0
        %713 = vmatpush2.msra.mxu0 0.0
        %714 = vmatprep.subr.mxu0 0.0
        %715 = vmatpush2.msra.mxu0 0.0
        %716 = vmatprep.subr.mxu0 0.0
        %717 = vmatpush2.msra.mxu0 0.0
        %718 = vmatprep.subr.mxu0 0.0
        %719 = vmatpush2.msra.mxu0 0.0
        %720 = vmatprep.subr.mxu0 0.0
        %721 = vmatpush2.msra.mxu0 0.0
        %722 = vmatprep.subr.mxu0 0.0
        %723 = vmatpush2.msra.mxu0 0.0
        %724 = vmatprep.subr.mxu0 0.0
        %725 = vmatpush2.msra.mxu0 0.0
        %726 = vmatprep.subr.mxu0 0.0
        %727 = vmatpush2.msra.mxu0 0.0
        %728 = vmatprep.subr.mxu0 0.0
        %729 = vmatpush2.msra.mxu0 0.0
        %730 = vmatprep.subr.mxu0 0.0
        %731 = vmatpush2.msra.mxu0 0.0
        %732 = vmatprep.subr.mxu0 0.0
        %733 = vmatpush2.msra.mxu0 0.0
        %734 = vmatprep.mubr.f32.mxu0 0.0
        %735 = vmatmul.mubr.f32.gmra.mxu0 %v668
        %v736 = vpop.f32.mrf.mxu0
        %v737 = vadd.f32 %v664, %v736
        %v738 = vpop.f32.mrf.mxu0
        %739 = vdwg.mxu0
        %s740 = scalar_lea.vmem %s3, 16
        %v741 = vld [vmem:[%s740] sm:$0xff]
        %742 = vrot.lane.b32.xlu0 %v586, 124
        %v743 = vpop.permute.xlu0 %742
        %v746 = vsel %vm593, %v741, 0
        %748 = vmatprep.subr.mxu0 0.0
        %749 = vmatpush1.msra.mxu0 0.0
        %750 = vmatprep.subr.mxu0 0.0
        %751 = vmatpush1.msra.mxu0 0.0
        %752 = vmatprep.subr.mxu0 0.0
        %753 = vmatpush1.msra.mxu0 0.0
        %754 = vmatprep.subr.mxu0 0.0
        %755 = vmatpush1.msra.mxu0 0.0
        %756 = vmatprep.subr.mxu0 0.0
        %757 = vmatpush1.msra.mxu0 0.0
        %758 = vmatprep.subr.mxu0 0.0
        %759 = vmatpush1.msra.mxu0 0.0
        %760 = vmatprep.subr.mxu0 0.0
        %761 = vmatpush1.msra.mxu0 0.0
        %762 = vmatprep.subr.mxu0 0.0
        %763 = vmatpush1.msra.mxu0 0.0
        %764 = vmatprep.subr.mxu0 0.0
        %765 = vmatpush1.msra.mxu0 0.0
        %766 = vmatprep.subr.mxu0 0.0
        %767 = vmatpush1.msra.mxu0 0.0
        %768 = vmatprep.subr.mxu0 0.0
        %769 = vmatpush1.msra.mxu0 0.0
        %770 = vmatprep.subr.mxu0 0.0
        %771 = vmatpush1.msra.mxu0 0.0
        %772 = vmatprep.subr.mxu0 0.0
        %773 = vmatpush1.msra.mxu0 0.0
        %774 = vmatprep.subr.mxu0 0.0
        %775 = vmatpush1.msra.mxu0 0.0
        %776 = vmatprep.subr.mxu0 0.0
        %777 = vmatpush1.msra.mxu0 0.0
        %778 = vmatprep.subr.mxu0 0.0
        %779 = vmatpush1.msra.mxu0 %v743
        %780 = vmatprep.subr.mxu0 0.0
        %781 = vmatpush2.msra.mxu0 0.0
        %782 = vmatprep.subr.mxu0 0.0
        %783 = vmatpush2.msra.mxu0 0.0
        %784 = vmatprep.subr.mxu0 0.0
        %785 = vmatpush2.msra.mxu0 0.0
        %786 = vmatprep.subr.mxu0 0.0
        %787 = vmatpush2.msra.mxu0 0.0
        %788 = vmatprep.subr.mxu0 0.0
        %789 = vmatpush2.msra.mxu0 0.0
        %790 = vmatprep.subr.mxu0 0.0
        %791 = vmatpush2.msra.mxu0 0.0
        %792 = vmatprep.subr.mxu0 0.0
        %793 = vmatpush2.msra.mxu0 0.0
        %794 = vmatprep.subr.mxu0 0.0
        %795 = vmatpush2.msra.mxu0 0.0
        %796 = vmatprep.subr.mxu0 0.0
        %797 = vmatpush2.msra.mxu0 0.0
        %798 = vmatprep.subr.mxu0 0.0
        %799 = vmatpush2.msra.mxu0 0.0
        %800 = vmatprep.subr.mxu0 0.0
        %801 = vmatpush2.msra.mxu0 0.0
        %802 = vmatprep.subr.mxu0 0.0
        %803 = vmatpush2.msra.mxu0 0.0
        %804 = vmatprep.subr.mxu0 0.0
        %805 = vmatpush2.msra.mxu0 0.0
        %806 = vmatprep.subr.mxu0 0.0
        %807 = vmatpush2.msra.mxu0 0.0
        %808 = vmatprep.subr.mxu0 0.0
        %809 = vmatpush2.msra.mxu0 0.0
        %810 = vmatprep.subr.mxu0 0.0
        %811 = vmatpush2.msra.mxu0 0.0
        %812 = vmatprep.mubr.f32.mxu0 0.0
        %813 = vmatmul.mubr.f32.gmra.mxu0 %v746
        %v814 = vpop.f32.mrf.mxu0
        %v815 = vadd.f32 0.0, %v814
        %v816 = vpop.f32.mrf.mxu0
        %817 = vdwg.mxu0
        %v818 = vadd.f32 %v737, %v815
        %v819 = vld [vmem:[%s4] sm:$0xff]
        %821 = vset.pattern.permute.xlu0 0
        %822 = vperm.xlu0 %821, %v819
        %v823 = vpop.permute.xlu0 %822
        %v825 = vadd.f32 %v818, %v823
        %v826 = vmax.f32 %v825, 0.0
        %v827 = vld [vmem:[%s5] sm:$0xff]
        %v828 = vld [vmem:[%s6] sm:$0xff]
        %830 = vset.pattern.permute.xlu0 0
        %831 = vperm.xlu0 %830, %v828
        %v832 = vpop.permute.xlu0 %831
        %v835 = vsel %vm339, %v827, 0
        %v837 = vsel %vm343, %v325, 0
        %839 = vmatprep.subr.mxu0 0.0
        %840 = vmatpush1.msra.mxu0 0.0
        %841 = vmatprep.subr.mxu0 0.0
        %842 = vmatpush1.msra.mxu0 0.0
        %843 = vmatprep.subr.mxu0 0.0
        %844 = vmatpush1.msra.mxu0 0.0
        %845 = vmatprep.subr.mxu0 0.0
        %846 = vmatpush1.msra.mxu0 0.0
        %847 = vmatprep.subr.mxu0 0.0
        %848 = vmatpush1.msra.mxu0 0.0
        %849 = vmatprep.subr.mxu0 0.0
        %850 = vmatpush1.msra.mxu0 0.0
        %851 = vmatprep.subr.mxu0 0.0
        %852 = vmatpush1.msra.mxu0 0.0
        %853 = vmatprep.subr.mxu0 0.0
        %854 = vmatpush1.msra.mxu0 0.0
        %855 = vmatprep.subr.mxu0 0.0
        %856 = vmatpush1.msra.mxu0 0.0
        %857 = vmatprep.subr.mxu0 0.0
        %858 = vmatpush1.msra.mxu0 0.0
        %859 = vmatprep.subr.mxu0 0.0
        %860 = vmatpush1.msra.mxu0 0.0
        %861 = vmatprep.subr.mxu0 0.0
        %862 = vmatpush1.msra.mxu0 0.0
        %863 = vmatprep.subr.mxu0 0.0
        %864 = vmatpush1.msra.mxu0 0.0
        %865 = vmatprep.subr.mxu0 0.0
        %866 = vmatpush1.msra.mxu0 0.0
        %867 = vmatprep.subr.mxu0 0.0
        %868 = vmatpush1.msra.mxu0 0.0
        %869 = vmatprep.subr.mxu0 0.0
        %870 = vmatpush1.msra.mxu0 %v837
        %871 = vmatprep.subr.mxu0 0.0
        %872 = vmatpush2.msra.mxu0 0.0
        %873 = vmatprep.subr.mxu0 0.0
        %874 = vmatpush2.msra.mxu0 0.0
        %875 = vmatprep.subr.mxu0 0.0
        %876 = vmatpush2.msra.mxu0 0.0
        %877 = vmatprep.subr.mxu0 0.0
        %878 = vmatpush2.msra.mxu0 0.0
        %879 = vmatprep.subr.mxu0 0.0
        %880 = vmatpush2.msra.mxu0 0.0
        %881 = vmatprep.subr.mxu0 0.0
        %882 = vmatpush2.msra.mxu0 0.0
        %883 = vmatprep.subr.mxu0 0.0
        %884 = vmatpush2.msra.mxu0 0.0
        %885 = vmatprep.subr.mxu0 0.0
        %886 = vmatpush2.msra.mxu0 0.0
        %887 = vmatprep.subr.mxu0 0.0
        %888 = vmatpush2.msra.mxu0 0.0
        %889 = vmatprep.subr.mxu0 0.0
        %890 = vmatpush2.msra.mxu0 0.0
        %891 = vmatprep.subr.mxu0 0.0
        %892 = vmatpush2.msra.mxu0 0.0
        %893 = vmatprep.subr.mxu0 0.0
        %894 = vmatpush2.msra.mxu0 0.0
        %895 = vmatprep.subr.mxu0 0.0
        %896 = vmatpush2.msra.mxu0 0.0
        %897 = vmatprep.subr.mxu0 0.0
        %898 = vmatpush2.msra.mxu0 0.0
        %899 = vmatprep.subr.mxu0 0.0
        %900 = vmatpush2.msra.mxu0 0.0
        %901 = vmatprep.subr.mxu0 0.0
        %902 = vmatpush2.msra.mxu0 0.0
        %903 = vmatprep.mubr.f32.mxu0 0.0
        %904 = vmatmul.mubr.f32.gmra.mxu0 %v835
        %v905 = vpop.f32.mrf.mxu0
        %v906 = vadd.f32 %v832, %v905
        %v907 = vpop.f32.mrf.mxu0
        %908 = vdwg.mxu0
        %v909 = vadd.f32 %v826, %v906
        %v910 = vmax.f32 %v909, 0.0
        %vm911 = vcmask 130048
        %912 = vst.msk [vmem:[%s291] sm:$0xff] %vm911, %v910
        %s913 = sand.u32 %s197, 1
        %s914 = scalar_lea.sflag [#allocation5], %s913
        %s915 = sand.u32 %s197, 1
        %s916 = smul.addr %s915, 8
        %s917 = scalar_lea.vmem [#allocation4], %s916
        // Predicated region
        $region57: #{tpu_custom_call.1} parent=47 // pred_check
          %p918 = pneg %p207
        $region58: #{tpu_custom_call.1} parent=47 // pred_check_branch
          %920 = sbr.rel (%p918) target = $region60
        $region59: #{tpu_custom_call.1} parent=47 // pred_region
          %s922 = ssub.s32 128, 128
          %923 = vsyncadd %s914, %s922
          %s924 = sadd.s32 %s26, %s25
          %s925 = smul.addr %s924, 128
          %s926 = scalar_lea.hbm %s7, %s925
          %s928 = sshll.u32 %s917, 4
          %s929 = int_to_ptr.vmem [resolvable:$true] %s928
          %931 = dma.vmem_to_hbm [thread:$0]  %s929, 128, %s926, %s914
        $region60: #{tpu_custom_call.1} parent=47 // pred_fallthru
          _
      $region48: #{tpu_custom_call.1} parent=5 // pred_fallthru
        _
      %p932 = scmp.le.s32.totalorder 2, %s16
      // Predicated region
      $region61: #{tpu_custom_call.1} parent=5 // pred_check
        %p933 = pneg %p932
      $region62: #{tpu_custom_call.1} parent=5 // pred_check_branch
        %935 = sbr.rel (%p933) target = $region64
      $region63: #{tpu_custom_call.1} parent=5 // pred_region
        %s936 = ssub.s32 %s16, 2
        // Predicated region
        $region65: #{tpu_custom_call.1} parent=63 // pred_check
          %p937 = pneg %p213
        $region66: #{tpu_custom_call.1} parent=63 // pred_check_branch
          %939 = sbr.rel (%p937) target = $region68
        $region67: #{tpu_custom_call.1} parent=63 // pred_region
          %s940 = sand.u32 %s198, 1
          %s941 = scalar_lea.sflag [#allocation5], %s940
          %s942 = sand.u32 %s198, 1
          %s943 = smul.addr %s942, 8
          %s944 = scalar_lea.vmem [#allocation4], %s943
          %945 = dma.done %s941, 128
        $region68: #{tpu_custom_call.1} parent=63 // pred_fallthru
          _
      $region64: #{tpu_custom_call.1} parent=5 // pred_fallthru
        _
    $region6: #{tpu_custom_call.1} parent=1 // loop_footer
      %s20 = sadd.s32 1, %s16
    $region7: #{tpu_custom_call.1} parent=1 // loop_footer_branch
      %15 = sbr.rel target = $region3
    $region8: #{tpu_custom_call.1} parent=1 // loop_exit
      _
    %946 = vsyncpa [#allocation5], 1
    %s947 = scalar_lea.sflag [#allocation5], 1
    %948 = vsyncpa %s947, 1

</llo_original>
